<compile_context>
chip_gen: v5e
topology: v5e:2x2
jax: 0.10.0
libtpu: 0.0.40
codegen_flags: <defaults>
</compile_context>

<pallas_src>
import jax
import jax.numpy as jnp
from jax import lax
from jax.experimental import pallas as pl
from jax.experimental.pallas import tpu as pltpu


def _round_up(x, m):
    return ((x + m - 1) // m) * m


# ---------------------------------------------------------------------------
# Fast path: whole (padded) table resident in VMEM, gather done on the MXU.
# ---------------------------------------------------------------------------
def _small_vocab_kernel(text_ref,   # (T_pad, 1)  int32 VMEM, -1 in padded slots
                        bag_ref,    # (1, T_pad)  int32 VMEM, -1 in padded slots
                        invc_ref,   # (B_TILE, 1) f32 VMEM, 1/count (0 for pad bags)
                        emb_ref,    # (V_pad, D_pad) f32 VMEM
                        wT_ref,     # (D_pad, C_pad) f32 VMEM
                        bias_ref,   # (1, C_pad)  f32 VMEM
                        out_ref):   # (B_TILE, C_pad) f32 VMEM
    B_TILE, _ = out_ref.shape
    T_pad = bag_ref.shape[1]
    V_pad, _ = emb_ref.shape

    bag_base = pl.program_id(0) * B_TILE

    # Bag one-hot (VPU): seg[b, t] = (bag_id[t] == global bag b).
    b_iota = lax.broadcasted_iota(jnp.int32, (B_TILE, T_pad), 0) + bag_base
    seg = (b_iota == bag_ref[...]).astype(jnp.float32)           # (B_TILE, T_pad)

    # Token one-hot (VPU): onehot[t, v] = (text[t] == v); padded tokens -> 0 rows.
    v_iota = lax.broadcasted_iota(jnp.int32, (T_pad, V_pad), 1)
    onehot = (v_iota == text_ref[...]).astype(jnp.float32)       # (T_pad, V_pad)

    # Three MXU matmuls: per-bag token counts -> pooled mean -> FC.
    m = jnp.dot(seg, onehot, preferred_element_type=jnp.float32)          # (B_TILE, V_pad)
    pooled = jnp.dot(m, emb_ref[...], preferred_element_type=jnp.float32) # (B_TILE, D_pad)
    pooled = pooled * invc_ref[...]                                       # mean scaling post-pool
    out_ref[...] = (
        jnp.dot(pooled, wT_ref[...], preferred_element_type=jnp.float32)
        + bias_ref[...]
    )


# ---------------------------------------------------------------------------
# Large-vocab path: HBM-resident table, bounded-window DMA row gather.
# ---------------------------------------------------------------------------
def _make_gather_kernel(n_tokens, window):
    def kernel(text_ref,   # scalar prefetch (SMEM): (n_tokens,) int32
               emb_hbm,    # (V_pad, D_pad) f32, stays in HBM (pl.ANY)
               bag_ref,    # (1, T_pad) int32 VMEM, -1 in padded slots
               invc_ref,   # (B_pad, 1) f32 VMEM
               wT_ref,     # (D_pad, C_pad) f32 VMEM
               bias_ref,   # (1, C_pad) f32 VMEM
               out_ref,    # (B_pad, C_pad) f32 VMEM
               gath,       # scratch: (T_pad, D_pad) f32 VMEM
               sems):      # scratch: DMA sems, (window,)
        T_pad, D_pad = gath.shape
        B_pad = out_ref.shape[0]

        def issue(t):
            tok = text_ref[t]
            pltpu.make_async_copy(
                emb_hbm.at[pl.ds(tok, 1), :],
                gath.at[pl.ds(t, 1), :],
                sems.at[t % window],
            ).start()

        # 1) Prime up to `window` row DMAs (bounded in-flight set).
        for t in range(min(window, n_tokens)):
            issue(t)

        # 2) Overlap VPU work with the in-flight DMAs:
        #    zero padded gather rows (load-bearing: avoids 0*NaN from stale VMEM)
        #    and build the 0/1 bag one-hot matrix.
        if T_pad > n_tokens:
            gath[pl.ds(n_tokens, T_pad - n_tokens), :] = jnp.zeros(
                (T_pad - n_tokens, D_pad), dtype=gath.dtype)
        b_iota = lax.broadcasted_iota(jnp.int32, (B_pad, T_pad), 0)
        seg = (b_iota == bag_ref[...]).astype(jnp.float32)       # (B_pad, T_pad)

        # 3) Steady state: wait copy t, issue copy t+window (same sem slot, so
        #    at most one outstanding DMA per semaphore).
        @pl.loop(0, n_tokens)
        def _(t):
            pltpu.make_async_copy(
                emb_hbm.at[pl.ds(0, 1), :],          # shape-only; sem carries the wait
                gath.at[pl.ds(t, 1), :],
                sems.at[t % window],
            ).wait()

            @pl.when(t + window < n_tokens)
            def _():
                issue(t + window)

        # 4) Two MXU matmuls: pooled sum -> mean -> FC + bias.
        # TODO(synk): for production token counts, tile the token axis (grid) so
        # gath fits v7x's 64 MiB VMEM, and store gath/wT in bf16 on v6e/v7x.
        pooled = jnp.dot(seg, gath[...], preferred_element_type=jnp.float32)
        pooled = pooled * invc_ref[...]
        out_ref[...] = (
            jnp.dot(pooled, wT_ref[...], preferred_element_type=jnp.float32)
            + bias_ref[...]
        )

    return kernel


# ---------------------------------------------------------------------------
# Init-time parameter preparation (padding hoisted out of the forward path).
# ---------------------------------------------------------------------------
def prepare_params(emb_weight, fc_weight, fc_bias):
    f32 = jnp.float32
    vocab, embed_dim = emb_weight.shape
    num_class = fc_weight.shape[0]

    V_pad = max(128, _round_up(vocab, 128))
    D_pad = max(128, _round_up(embed_dim, 128))
    C_pad = max(128, _round_up(num_class, 128))

    emb_pad = jnp.zeros((V_pad, D_pad), f32).at[:vocab, :embed_dim].set(
        emb_weight.astype(f32))
    wT_pad = jnp.zeros((D_pad, C_pad), f32).at[:embed_dim, :num_class].set(
        fc_weight.T.astype(f32))
    bias_pad = jnp.zeros((1, C_pad), f32).at[0, :num_class].set(fc_bias.astype(f32))

    return {
        "vocab": vocab, "embed_dim": embed_dim, "num_class": num_class,
        "V_pad": V_pad, "D_pad": D_pad, "C_pad": C_pad,
        "emb_pad": emb_pad, "wT_pad": wT_pad, "bias_pad": bias_pad,
    }


# ---------------------------------------------------------------------------
# Forward: EmbeddingBag(mean) + Linear.
# ---------------------------------------------------------------------------
def neural_net_forward(params, text, offsets, *,
                       vmem_table_limit_bytes=4 * 1024 * 1024,
                       dma_window=8):
    f32 = jnp.float32
    text = jnp.asarray(text, jnp.int32)
    offsets = jnp.asarray(offsets, jnp.int32)

    n_tokens = text.shape[0]
    n_bags = offsets.shape[0]
    vocab = params["vocab"]
    num_class = params["num_class"]
    V_pad, D_pad, C_pad = params["V_pad"], params["D_pad"], params["C_pad"]
    emb_pad, wT_pad, bias_pad = params["emb_pad"], params["wT_pad"], params["bias_pad"]

    T_pad = max(128, _round_up(n_tokens, 128))
    if n_bags >= 256:
        B_TILE = 256
    else:
        B_TILE = max(8, _round_up(n_bags, 8))
    B_pad = _round_up(n_bags, B_TILE)

    # Per-call glue (O(n_tokens + n_bags) only — no full-table work here).
    text = jnp.clip(text, 0, vocab - 1)   # NOTE: silently clamps OOB ids (PyTorch would raise)
    tok_pos = jnp.arange(n_tokens, dtype=jnp.int32)
    bag_id = (jnp.searchsorted(offsets, tok_pos, side="right") - 1).astype(jnp.int32)
    ends = jnp.concatenate([offsets[1:], jnp.array([n_tokens], jnp.int32)])
    counts = (ends - offsets).astype(jnp.int32)

    bag_row = jnp.full((1, T_pad), -1, jnp.int32).at[0, :n_tokens].set(bag_id)
    invc_col = jnp.zeros((B_pad, 1), f32).at[:n_bags, 0].set(
        1.0 / jnp.maximum(counts, 1).astype(f32))

    table_bytes = V_pad * D_pad * 4

    if table_bytes <= vmem_table_limit_bytes:
        # -------- Fast path: table in VMEM, gather via MXU one-hot matmuls. ----
        text_col = jnp.full((T_pad, 1), -1, jnp.int32).at[:n_tokens, 0].set(text)
        grid = (B_pad // B_TILE,)
        # TODO(synk): mark the shared resident inputs pipeline_mode=pl.Buffered(1)
        # on v7x to avoid pointless double-buffering of the table.
        grid_spec = pltpu.PrefetchScalarGridSpec(
            num_scalar_prefetch=0,
            grid=grid,
            in_specs=[
                pl.BlockSpec((T_pad, 1), lambda i: (0, 0)),       # token ids (col)
                pl.BlockSpec((1, T_pad), lambda i: (0, 0)),       # bag ids (row)
                pl.BlockSpec((B_TILE, 1), lambda i: (i, 0)),      # 1/count
                pl.BlockSpec((V_pad, D_pad), lambda i: (0, 0)),   # embedding table
                pl.BlockSpec((D_pad, C_pad), lambda i: (0, 0)),   # fc weight^T
                pl.BlockSpec((1, C_pad), lambda i: (0, 0)),       # fc bias
            ],
            out_specs=pl.BlockSpec((B_TILE, C_pad), lambda i: (i, 0)),
        )
        out_pad = pl.pallas_call(
            _small_vocab_kernel,
            out_shape=jax.ShapeDtypeStruct((B_pad, C_pad), f32),
            grid_spec=grid_spec,
            compiler_params=pltpu.CompilerParams(
                dimension_semantics=("parallel",)),   # bag tiles shard across v7x cores
        )(text_col, bag_row, invc_col, emb_pad, wT_pad, bias_pad)
    else:
        # -------- Large-vocab path: HBM table + bounded-window row DMA gather. --
        # TODO(synk): dedupe repeated token ids in the wrapper (v5e) to cut row DMAs.
        window = max(1, min(dma_window, n_tokens))
        grid_spec = pltpu.PrefetchScalarGridSpec(
            num_scalar_prefetch=1,                                # text -> SMEM
            grid=(1,),
            in_specs=[
                pl.BlockSpec(memory_space=pl.ANY),                    # table stays in HBM
                pl.BlockSpec((1, T_pad), lambda i, *_: (0, 0)),       # bag ids
                pl.BlockSpec((B_pad, 1), lambda i, *_: (0, 0)),       # 1/count
                pl.BlockSpec((D_pad, C_pad), lambda i, *_: (0, 0)),   # fc weight^T
                pl.BlockSpec((1, C_pad), lambda i, *_: (0, 0)),       # fc bias
            ],
            out_specs=pl.BlockSpec((B_pad, C_pad), lambda i, *_: (0, 0)),
            scratch_shapes=[
                pltpu.VMEM((T_pad, D_pad), f32),          # gathered rows
                pltpu.SemaphoreType.DMA((window,)),       # bounded in-flight window
            ],
        )
        out_pad = pl.pallas_call(
            _make_gather_kernel(n_tokens, window),
            out_shape=jax.ShapeDtypeStruct((B_pad, C_pad), f32),
            grid_spec=grid_spec,
            compiler_params=pltpu.CompilerParams(
                dimension_semantics=("arbitrary",)),
        )(text, emb_pad, bag_row, invc_col, wT_pad, bias_pad)

    return out_pad[:n_bags, :num_class]


if __name__ == "__main__":
    # Small, deterministic problem consistent with the module's forward.
    vocab_size, embed_dim, num_class = 50, 32, 4
    n_tokens, n_bags = 16, 4

    key = jax.random.PRNGKey(0)
    k_emb, k_fc, k_txt = jax.random.split(key, 3)

    initrange = 0.5
    emb_weight = jax.random.uniform(k_emb, (vocab_size, embed_dim),
                                    minval=-initrange, maxval=initrange,
                                    dtype=jnp.float32)
    fc_weight = jax.random.uniform(k_fc, (num_class, embed_dim),
                                   minval=-initrange, maxval=initrange,
                                   dtype=jnp.float32)
    fc_bias = jnp.zeros((num_class,), dtype=jnp.float32)

    text = jax.random.randint(k_txt, (n_tokens,), 0, vocab_size, dtype=jnp.int32)
    offsets = jnp.array([0, 5, 9, 12], dtype=jnp.int32)   # 4 bags

    # One-time (init) padding; forward calls reuse the padded params.
    params = prepare_params(emb_weight, fc_weight, fc_bias)

    # Fast path (table fits VMEM budget).
    out_fast = jax.block_until_ready(neural_net_forward(params, text, offsets))
    # Large-vocab path, forced (exercise the HBM gather kernel too).
    out_gather = jax.block_until_ready(
        neural_net_forward(params, text, offsets, vmem_table_limit_bytes=0))

    # Pure-JAX reference (EmbeddingBag mean + Linear).
    tok_pos = jnp.arange(n_tokens, dtype=jnp.int32)
    bag_id = jnp.searchsorted(offsets, tok_pos, side="right") - 1
    ends = jnp.concatenate([offsets[1:], jnp.array([n_tokens], jnp.int32)])
    counts = jnp.maximum(ends - offsets, 1).astype(jnp.float32)
    gathered = emb_weight[text]                              # (n_tokens, D)
    pooled_ref = jax.ops.segment_sum(gathered, bag_id,
                                     num_segments=n_bags) / counts[:, None]
    expected = pooled_ref @ fc_weight.T + fc_bias

    assert out_fast.shape == (n_bags, num_class)
    assert out_gather.shape == (n_bags, num_class)
    assert jnp.allclose(out_fast, expected, atol=1e-5, rtol=1e-5), \
        "fast path mismatch vs reference"
    assert jnp.allclose(out_gather, expected, atol=1e-5, rtol=1e-5), \
        "gather path mismatch vs reference"
    print("KERNEL_OK")
</pallas_src>

<mosaic_0001>
module attributes {stable_mosaic.version = 11 : i64} {
  func.func @_small_vocab_kernel(%arg0: i32, %arg1: memref<128x1xi32, #tpu.memory_space<vmem>>, %arg2: memref<1x128xi32, #tpu.memory_space<vmem>>, %arg3: memref<8x1xf32, #tpu.memory_space<vmem>>, %arg4: memref<128x128xf32, #tpu.memory_space<vmem>>, %arg5: memref<128x128xf32, #tpu.memory_space<vmem>>, %arg6: memref<1x128xf32, #tpu.memory_space<vmem>>, %arg7: memref<8x128xf32, #tpu.memory_space<vmem>>) attributes {dimension_semantics = [#tpu.dimension_semantics<parallel>], iteration_bounds = array<i64: 1>, scalar_prefetch = 0 : i64, scratch_operands = 0 : i64, tpu.core_type = #tpu.core_type<tc>, window_params = [{pipeline_mode = #tpu.pipeline_mode<synchronous>, transform_indices = @transform_0, window_bounds = array<i64: 128, 1>}, {pipeline_mode = #tpu.pipeline_mode<synchronous>, transform_indices = @transform_1, window_bounds = array<i64: 1, 128>}, {transform_indices = @transform_2, window_bounds = array<i64: 8, 1>}, {pipeline_mode = #tpu.pipeline_mode<synchronous>, transform_indices = @transform_3, window_bounds = array<i64: 128, 128>}, {pipeline_mode = #tpu.pipeline_mode<synchronous>, transform_indices = @transform_4, window_bounds = array<i64: 128, 128>}, {pipeline_mode = #tpu.pipeline_mode<synchronous>, transform_indices = @transform_5, window_bounds = array<i64: 1, 128>}, {transform_indices = @transform_6, window_bounds = array<i64: 8, 128>}]} {
    %c8_i32 = arith.constant 8 : i32
    %0 = arith.muli %arg0, %c8_i32 : i32
    %1 = tpu.iota {dimensions = array<i32: 0>} : vector<8x128xi32>
    %2 = vector.broadcast %0 : i32 to vector<8x128xi32>
    %3 = arith.addi %1, %2 : vector<8x128xi32>
    %c0 = arith.constant 0 : index
    %c0_0 = arith.constant 0 : index
    %4 = vector.load %arg2[%c0, %c0_0] : memref<1x128xi32, #tpu.memory_space<vmem>>, vector<1x128xi32>
    %5 = vector.broadcast %4 : vector<1x128xi32> to vector<8x128xi32>
    %6 = arith.cmpi eq, %3, %5 : vector<8x128xi32>
    %7 = arith.extui %6 : vector<8x128xi1> to vector<8x128xi32>
    %8 = arith.sitofp %7 : vector<8x128xi32> to vector<8x128xf32>
    %9 = tpu.iota {dimensions = array<i32: 1>} : vector<128x128xi32>
    %c0_1 = arith.constant 0 : index
    %c0_2 = arith.constant 0 : index
    %10 = vector.load %arg1[%c0_1, %c0_2] : memref<128x1xi32, #tpu.memory_space<vmem>>, vector<128x1xi32>
    %11 = vector.broadcast %10 : vector<128x1xi32> to vector<128x128xi32>
    %12 = arith.cmpi eq, %9, %11 : vector<128x128xi32>
    %13 = arith.extui %12 : vector<128x128xi1> to vector<128x128xi32>
    %14 = arith.sitofp %13 : vector<128x128xi32> to vector<128x128xf32>
    %cst = arith.constant dense<0.000000e+00> : vector<8x128xf32>
    %15 = tpu.matmul %8, %14, %cst {dimension_numbers = #tpu.dot_dimension_numbers<[1], [0], [0], [1], [0, 0, 1, 1], [], []>} : vector<8x128xf32>, vector<128x128xf32>, vector<8x128xf32> -> vector<8x128xf32>
    %c0_3 = arith.constant 0 : index
    %c0_4 = arith.constant 0 : index
    %16 = vector.load %arg4[%c0_3, %c0_4] : memref<128x128xf32, #tpu.memory_space<vmem>>, vector<128x128xf32>
    %cst_5 = arith.constant dense<0.000000e+00> : vector<8x128xf32>
    %17 = tpu.matmul %15, %16, %cst_5 {dimension_numbers = #tpu.dot_dimension_numbers<[1], [0], [0], [1], [0, 0, 1, 1], [], []>} : vector<8x128xf32>, vector<128x128xf32>, vector<8x128xf32> -> vector<8x128xf32>
    %c0_6 = arith.constant 0 : index
    %c0_7 = arith.constant 0 : index
    %18 = vector.load %arg3[%c0_6, %c0_7] : memref<8x1xf32, #tpu.memory_space<vmem>>, vector<8x1xf32>
    %19 = vector.broadcast %18 : vector<8x1xf32> to vector<8x128xf32>
    %20 = arith.mulf %17, %19 : vector<8x128xf32>
    %c0_8 = arith.constant 0 : index
    %c0_9 = arith.constant 0 : index
    %21 = vector.load %arg5[%c0_8, %c0_9] : memref<128x128xf32, #tpu.memory_space<vmem>>, vector<128x128xf32>
    %cst_10 = arith.constant dense<0.000000e+00> : vector<8x128xf32>
    %22 = tpu.matmul %20, %21, %cst_10 {dimension_numbers = #tpu.dot_dimension_numbers<[1], [0], [0], [1], [0, 0, 1, 1], [], []>} : vector<8x128xf32>, vector<128x128xf32>, vector<8x128xf32> -> vector<8x128xf32>
    %c0_11 = arith.constant 0 : index
    %c0_12 = arith.constant 0 : index
    %23 = vector.load %arg6[%c0_11, %c0_12] : memref<1x128xf32, #tpu.memory_space<vmem>>, vector<1x128xf32>
    %24 = vector.broadcast %23 : vector<1x128xf32> to vector<8x128xf32>
    %25 = arith.addf %22, %24 : vector<8x128xf32>
    %c0_13 = arith.constant 0 : index
    %c0_14 = arith.constant 0 : index
    %26 = vector.load %arg7[%c0_13, %c0_14] : memref<8x128xf32, #tpu.memory_space<vmem>>, vector<8x128xf32>
    tpu.vector_store %arg7[%c0_13, %c0_14], %25 {strides = array<i32>} : memref<8x128xf32, #tpu.memory_space<vmem>>, vector<8x128xf32>,
    return
  }
  func.func @transform_0(%arg0: i32) -> (i32, i32) {
    %c0_i32 = arith.constant 0 : i32
    %c0_i32_0 = arith.constant 0 : i32
    %c0_i32_1 = arith.constant 0 : i32
    return %c0_i32, %c0_i32_0 : i32, i32
  }
  func.func @transform_1(%arg0: i32) -> (i32, i32) {
    %c0_i32 = arith.constant 0 : i32
    %c0_i32_0 = arith.constant 0 : i32
    %c0_i32_1 = arith.constant 0 : i32
    return %c0_i32, %c0_i32_0 : i32, i32
  }
  func.func @transform_2(%arg0: i32) -> (i32, i32) {
    %c0_i32 = arith.constant 0 : i32
    %c0_i32_0 = arith.constant 0 : i32
    return %arg0, %c0_i32 : i32, i32
  }
  func.func @transform_3(%arg0: i32) -> (i32, i32) {
    %c0_i32 = arith.constant 0 : i32
    %c0_i32_0 = arith.constant 0 : i32
    %c0_i32_1 = arith.constant 0 : i32
    return %c0_i32, %c0_i32_0 : i32, i32
  }
  func.func @transform_4(%arg0: i32) -> (i32, i32) {
    %c0_i32 = arith.constant 0 : i32
    %c0_i32_0 = arith.constant 0 : i32
    %c0_i32_1 = arith.constant 0 : i32
    return %c0_i32, %c0_i32_0 : i32, i32
  }
  func.func @transform_5(%arg0: i32) -> (i32, i32) {
    %c0_i32 = arith.constant 0 : i32
    %c0_i32_0 = arith.constant 0 : i32
    %c0_i32_1 = arith.constant 0 : i32
    return %c0_i32, %c0_i32_0 : i32, i32
  }
  func.func @transform_6(%arg0: i32) -> (i32, i32) {
    %c0_i32 = arith.constant 0 : i32
    %c0_i32_0 = arith.constant 0 : i32
    return %arg0, %c0_i32 : i32, i32
  }
}

</mosaic_0001>

<llo_original>
// kernel: tpu_custom_call.1
$region0: #{tpu_custom_call.1}
  #allocation0 [shape = 'u32[]', space=smem, size = 0x4, offset = 0x4, fixed_abs, tag = 'smem constant byte address 0x4 - core index']
  #allocation1 [shape = 'u32[72,128]{1,0:T(1,128)}', space=vmem, size = 0x9000, scoped, tag = 'internal scratch']
  %s0 = inlined_call_operand.vmem [shape: s32[128,1], index: 0, kind: input, shape index: {}]
  %s1 = inlined_call_operand.vmem [shape: s32[1,128], index: 1, kind: input, shape index: {}]
  %s2 = inlined_call_operand.vmem [shape: f32[8,1], index: 2, kind: input, shape index: {}]
  %s3 = inlined_call_operand.vmem [shape: f32[128,128], index: 3, kind: input, shape index: {}]
  %s4 = inlined_call_operand.hbm [shape: f32[128,128], index: 4, kind: input, shape index: {}]
  %s5 = inlined_call_operand.vmem [shape: f32[1,128], index: 5, kind: input, shape index: {}]
  %s6 = inlined_call_operand.hbm [shape: f32[8,128], index: 6, kind: output, shape index: {}]
  %s7 = sld [smem:[#allocation0]]
  $region38: #{tpu_custom_call.1} parent=0
    _
  %s9 = ssub.s32 1, %s7
  %s10 = scalar_select 0, %s9, %s7
  $region1: #{tpu_custom_call.1} parent=0
    #allocation2 [shape = 'u8[65536]{0}', space=vmem, size = 0x10000, scoped, tag = 'input window, operand 4, single buffered']
    #allocation3 [shape = 's32[1]{0}', space=sflag, size = 0x4, scoped, tag = 'scoped memory for tpu_custom_call.1']
    #allocation4 [shape = 's32[1]{0}', space=sflag, size = 0x4, scoped, tag = 'scoped memory for tpu_custom_call.1']
    #allocation5 [shape = 'u8[4096]{0}', space=vmem, size = 0x1000, scoped, tag = 'output window, operand 0, single buffered']
    %11 = vsyncpa [#allocation3], 0
    %12 = vsyncpa [#allocation4], 0
    // Predicated region
    $region2: #{tpu_custom_call.1} parent=1 // pred_check
      _
    $region3: #{tpu_custom_call.1} parent=1 // pred_check_branch
      %14 = sbr.rel (0) target = $region5
    $region4: #{tpu_custom_call.1} parent=1 // pred_region
      _
    $region5: #{tpu_custom_call.1} parent=1 // pred_fallthru
      _
    // Predicated region
    $region6: #{tpu_custom_call.1} parent=1 // pred_check
      _
    $region7: #{tpu_custom_call.1} parent=1 // pred_check_branch
      %16 = sbr.rel (0) target = $region9
    $region8: #{tpu_custom_call.1} parent=1 // pred_region
      _
    $region9: #{tpu_custom_call.1} parent=1 // pred_fallthru
      _
    // Predicated region
    $region10: #{tpu_custom_call.1} parent=1 // pred_check
      _
    $region11: #{tpu_custom_call.1} parent=1 // pred_check_branch
      %18 = sbr.rel (0) target = $region13
    $region12: #{tpu_custom_call.1} parent=1 // pred_region
      _
    $region13: #{tpu_custom_call.1} parent=1 // pred_fallthru
      _
    // Predicated region
    $region14: #{tpu_custom_call.1} parent=1 // pred_check
      _
    $region15: #{tpu_custom_call.1} parent=1 // pred_check_branch
      %20 = sbr.rel (0) target = $region17
    $region16: #{tpu_custom_call.1} parent=1 // pred_region
      _
    $region17: #{tpu_custom_call.1} parent=1 // pred_fallthru
      _
    // Predicated region
    $region18: #{tpu_custom_call.1} parent=1 // pred_check
      _
    $region19: #{tpu_custom_call.1} parent=1 // pred_check_branch
      %22 = sbr.rel (0) target = $region21
    $region20: #{tpu_custom_call.1} parent=1 // pred_region
      %24 = vsyncadd [#allocation3], 0
      %s25 = sshll.u32 %s4, 4
      %s26 = int_to_ptr.hbm [resolvable:$true] %s25
      %s27 = sshll.u32 [#allocation2], 4
      %s28 = int_to_ptr.vmem [resolvable:$true] %s27
      %33 = dma.hbm_to_vmem [thread:$0]  %s26, 2048, %s28, [#allocation3], 128, 128, 8
    $region21: #{tpu_custom_call.1} parent=1 // pred_fallthru
      _
    // Predicated region
    $region22: #{tpu_custom_call.1} parent=1 // pred_check
      _
    $region23: #{tpu_custom_call.1} parent=1 // pred_check_branch
      %35 = sbr.rel (0) target = $region25
    $region24: #{tpu_custom_call.1} parent=1 // pred_region
      _
    $region25: #{tpu_custom_call.1} parent=1 // pred_fallthru
      _
    // Predicated region
    $region26: #{tpu_custom_call.1} parent=1 // pred_check
      _
    $region27: #{tpu_custom_call.1} parent=1 // pred_check_branch
      %37 = sbr.rel (0) target = $region29
    $region28: #{tpu_custom_call.1} parent=1 // pred_region
      %39 = dma.done [#allocation3], 2048
    $region29: #{tpu_custom_call.1} parent=1 // pred_fallthru
      _
    %s40 = smul.u32 0, 8
    %v41 = vlaneseq
    %v42 = vshrl.u32 %v41, 7
    %v43 = vstv %s40
    %v44 = vadd.s32 %v42, %v43
    %v45 = vld [vmem:[%s1] sm:$0x1]
    %v46 = vperm.slane %v45, 0
    %vm47 = vcmp.eq.s32.totalorder %v44, %v46
    %v48 = vsel %vm47, 1, 0
    %v49 = vcvt.s32.f32 %v48
    %v50 = vlaneseq
    %v51 = vand.u32 %v50, 127
    %v52 = vld [vmem:[%s0] sm:$0xff]
    %v53 = vld [vmem:[%s0 + $0x8] sm:$0xff]
    %v54 = vld [vmem:[%s0 + $0x10] sm:$0xff]
    %v55 = vld [vmem:[%s0 + $0x18] sm:$0xff]
    %v56 = vld [vmem:[%s0 + $0x20] sm:$0xff]
    %v57 = vld [vmem:[%s0 + $0x28] sm:$0xff]
    %v58 = vld [vmem:[%s0 + $0x30] sm:$0xff]
    %v59 = vld [vmem:[%s0 + $0x38] sm:$0xff]
    %v60 = vld [vmem:[%s0 + $0x40] sm:$0xff]
    %v61 = vld [vmem:[%s0 + $0x48] sm:$0xff]
    %v62 = vld [vmem:[%s0 + $0x50] sm:$0xff]
    %v63 = vld [vmem:[%s0 + $0x58] sm:$0xff]
    %v64 = vld [vmem:[%s0 + $0x60] sm:$0xff]
    %v65 = vld [vmem:[%s0 + $0x68] sm:$0xff]
    %v66 = vld [vmem:[%s0 + $0x70] sm:$0xff]
    %v67 = vld [vmem:[%s0 + $0x78] sm:$0xff]
    %68 = vset.pattern.permute.xlu0 0
    %69 = vperm.xlu0 %68, %v52
    %v70 = vpop.permute.xlu0 %69
    %71 = vset.pattern.permute.xlu0 0
    %72 = vperm.xlu0 %71, %v53
    %v73 = vpop.permute.xlu0 %72
    %74 = vset.pattern.permute.xlu0 0
    %75 = vperm.xlu0 %74, %v54
    %v76 = vpop.permute.xlu0 %75
    %77 = vset.pattern.permute.xlu0 0
    %78 = vperm.xlu0 %77, %v55
    %v79 = vpop.permute.xlu0 %78
    %80 = vset.pattern.permute.xlu0 0
    %81 = vperm.xlu0 %80, %v56
    %v82 = vpop.permute.xlu0 %81
    %83 = vset.pattern.permute.xlu0 0
    %84 = vperm.xlu0 %83, %v57
    %v85 = vpop.permute.xlu0 %84
    %86 = vset.pattern.permute.xlu0 0
    %87 = vperm.xlu0 %86, %v58
    %v88 = vpop.permute.xlu0 %87
    %89 = vset.pattern.permute.xlu0 0
    %90 = vperm.xlu0 %89, %v59
    %v91 = vpop.permute.xlu0 %90
    %92 = vset.pattern.permute.xlu0 0
    %93 = vperm.xlu0 %92, %v60
    %v94 = vpop.permute.xlu0 %93
    %95 = vset.pattern.permute.xlu0 0
    %96 = vperm.xlu0 %95, %v61
    %v97 = vpop.permute.xlu0 %96
    %98 = vset.pattern.permute.xlu0 0
    %99 = vperm.xlu0 %98, %v62
    %v100 = vpop.permute.xlu0 %99
    %101 = vset.pattern.permute.xlu0 0
    %102 = vperm.xlu0 %101, %v63
    %v103 = vpop.permute.xlu0 %102
    %104 = vset.pattern.permute.xlu0 0
    %105 = vperm.xlu0 %104, %v64
    %v106 = vpop.permute.xlu0 %105
    %107 = vset.pattern.permute.xlu0 0
    %108 = vperm.xlu0 %107, %v65
    %v109 = vpop.permute.xlu0 %108
    %110 = vset.pattern.permute.xlu0 0
    %111 = vperm.xlu0 %110, %v66
    %v112 = vpop.permute.xlu0 %111
    %113 = vset.pattern.permute.xlu0 0
    %114 = vperm.xlu0 %113, %v67
    %v115 = vpop.permute.xlu0 %114
    %vm116 = vcmp.eq.s32.totalorder %v51, %v70
    %vm117 = vcmp.eq.s32.totalorder %v51, %v73
    %vm118 = vcmp.eq.s32.totalorder %v51, %v76
    %vm119 = vcmp.eq.s32.totalorder %v51, %v79
    %vm120 = vcmp.eq.s32.totalorder %v51, %v82
    %vm121 = vcmp.eq.s32.totalorder %v51, %v85
    %vm122 = vcmp.eq.s32.totalorder %v51, %v88
    %vm123 = vcmp.eq.s32.totalorder %v51, %v91
    %vm124 = vcmp.eq.s32.totalorder %v51, %v94
    %vm125 = vcmp.eq.s32.totalorder %v51, %v97
    %vm126 = vcmp.eq.s32.totalorder %v51, %v100
    %vm127 = vcmp.eq.s32.totalorder %v51, %v103
    %vm128 = vcmp.eq.s32.totalorder %v51, %v106
    %vm129 = vcmp.eq.s32.totalorder %v51, %v109
    %vm130 = vcmp.eq.s32.totalorder %v51, %v112
    %vm131 = vcmp.eq.s32.totalorder %v51, %v115
    %v132 = vsel %vm116, 1, 0
    %v133 = vsel %vm117, 1, 0
    %v134 = vsel %vm118, 1, 0
    %v135 = vsel %vm119, 1, 0
    %v136 = vsel %vm120, 1, 0
    %v137 = vsel %vm121, 1, 0
    %v138 = vsel %vm122, 1, 0
    %v139 = vsel %vm123, 1, 0
    %v140 = vsel %vm124, 1, 0
    %v141 = vsel %vm125, 1, 0
    %v142 = vsel %vm126, 1, 0
    %v143 = vsel %vm127, 1, 0
    %v144 = vsel %vm128, 1, 0
    %v145 = vsel %vm129, 1, 0
    %v146 = vsel %vm130, 1, 0
    %v147 = vsel %vm131, 1, 0
    %v148 = vcvt.s32.f32 %v132
    %v149 = vcvt.s32.f32 %v133
    %v150 = vcvt.s32.f32 %v134
    %v151 = vcvt.s32.f32 %v135
    %v152 = vcvt.s32.f32 %v136
    %v153 = vcvt.s32.f32 %v137
    %v154 = vcvt.s32.f32 %v138
    %v155 = vcvt.s32.f32 %v139
    %v156 = vcvt.s32.f32 %v140
    %v157 = vcvt.s32.f32 %v141
    %v158 = vcvt.s32.f32 %v142
    %v159 = vcvt.s32.f32 %v143
    %v160 = vcvt.s32.f32 %v144
    %v161 = vcvt.s32.f32 %v145
    %v162 = vcvt.s32.f32 %v146
    %v163 = vcvt.s32.f32 %v147
    %164 = vmatpush.msra.mxu0 %v163
    %165 = vmatpush.msra.mxu0 %v162
    %166 = vmatpush.msra.mxu0 %v161
    %167 = vmatpush.msra.mxu0 %v160
    %168 = vmatpush.msra.mxu0 %v159
    %169 = vmatpush.msra.mxu0 %v158
    %170 = vmatpush.msra.mxu0 %v157
    %171 = vmatpush.msra.mxu0 %v156
    %172 = vmatpush.msra.mxu0 %v155
    %173 = vmatpush.msra.mxu0 %v154
    %174 = vmatpush.msra.mxu0 %v153
    %175 = vmatpush.msra.mxu0 %v152
    %176 = vmatpush.msra.mxu0 %v151
    %177 = vmatpush.msra.mxu0 %v150
    %178 = vmatpush.msra.mxu0 %v149
    %179 = vmatpush.msra.mxu0 %v148
    %180 = vmatmul.f32.gmra.mxu0 %v49
    %v181 = vpop.f32.mrf.mxu0
    %v182 = vadd.f32 0.0, %v181
    %183 = vdwg.mxu0
    %v184 = vld [vmem:[%s3] sm:$0xff]
    %v185 = vld [vmem:[%s3 + $0x8] sm:$0xff]
    %v186 = vld [vmem:[%s3 + $0x10] sm:$0xff]
    %v187 = vld [vmem:[%s3 + $0x18] sm:$0xff]
    %v188 = vld [vmem:[%s3 + $0x20] sm:$0xff]
    %v189 = vld [vmem:[%s3 + $0x28] sm:$0xff]
    %v190 = vld [vmem:[%s3 + $0x30] sm:$0xff]
    %v191 = vld [vmem:[%s3 + $0x38] sm:$0xff]
    %v192 = vld [vmem:[%s3 + $0x40] sm:$0xff]
    %v193 = vld [vmem:[%s3 + $0x48] sm:$0xff]
    %v194 = vld [vmem:[%s3 + $0x50] sm:$0xff]
    %v195 = vld [vmem:[%s3 + $0x58] sm:$0xff]
    %v196 = vld [vmem:[%s3 + $0x60] sm:$0xff]
    %v197 = vld [vmem:[%s3 + $0x68] sm:$0xff]
    %v198 = vld [vmem:[%s3 + $0x70] sm:$0xff]
    %v199 = vld [vmem:[%s3 + $0x78] sm:$0xff]
    %200 = vmatpush.msra.mxu0 %v199
    %201 = vmatpush.msra.mxu0 %v198
    %202 = vmatpush.msra.mxu0 %v197
    %203 = vmatpush.msra.mxu0 %v196
    %204 = vmatpush.msra.mxu0 %v195
    %205 = vmatpush.msra.mxu0 %v194
    %206 = vmatpush.msra.mxu0 %v193
    %207 = vmatpush.msra.mxu0 %v192
    %208 = vmatpush.msra.mxu0 %v191
    %209 = vmatpush.msra.mxu0 %v190
    %210 = vmatpush.msra.mxu0 %v189
    %211 = vmatpush.msra.mxu0 %v188
    %212 = vmatpush.msra.mxu0 %v187
    %213 = vmatpush.msra.mxu0 %v186
    %214 = vmatpush.msra.mxu0 %v185
    %215 = vmatpush.msra.mxu0 %v184
    %216 = vmatmul.f32.gmra.mxu0 %v182
    %v217 = vpop.f32.mrf.mxu0
    %v218 = vadd.f32 0.0, %v217
    %219 = vdwg.mxu0
    %v220 = vld [vmem:[%s2] sm:$0xff]
    %222 = vset.pattern.permute.xlu0 0
    %223 = vperm.xlu0 %222, %v220
    %v224 = vpop.permute.xlu0 %223
    %v226 = vmul.f32 %v218, %v224
    %v227 = vld [vmem:[#allocation2] sm:$0xff]
    %v228 = vld [vmem:[#allocation2 + $0x8] sm:$0xff]
    %v229 = vld [vmem:[#allocation2 + $0x10] sm:$0xff]
    %v230 = vld [vmem:[#allocation2 + $0x18] sm:$0xff]
    %v231 = vld [vmem:[#allocation2 + $0x20] sm:$0xff]
    %v232 = vld [vmem:[#allocation2 + $0x28] sm:$0xff]
    %v233 = vld [vmem:[#allocation2 + $0x30] sm:$0xff]
    %v234 = vld [vmem:[#allocation2 + $0x38] sm:$0xff]
    %v235 = vld [vmem:[#allocation2 + $0x40] sm:$0xff]
    %v236 = vld [vmem:[#allocation2 + $0x48] sm:$0xff]
    %v237 = vld [vmem:[#allocation2 + $0x50] sm:$0xff]
    %v238 = vld [vmem:[#allocation2 + $0x58] sm:$0xff]
    %v239 = vld [vmem:[#allocation2 + $0x60] sm:$0xff]
    %v240 = vld [vmem:[#allocation2 + $0x68] sm:$0xff]
    %v241 = vld [vmem:[#allocation2 + $0x70] sm:$0xff]
    %v242 = vld [vmem:[#allocation2 + $0x78] sm:$0xff]
    %v243 = vld [vmem:[%s5] sm:$0x1]
    %v245 = vperm.slane %v243, 0
    %247 = vmatpush.msra.mxu0 %v242
    %248 = vmatpush.msra.mxu0 %v241
    %249 = vmatpush.msra.mxu0 %v240
    %250 = vmatpush.msra.mxu0 %v239
    %251 = vmatpush.msra.mxu0 %v238
    %252 = vmatpush.msra.mxu0 %v237
    %253 = vmatpush.msra.mxu0 %v236
    %254 = vmatpush.msra.mxu0 %v235
    %255 = vmatpush.msra.mxu0 %v234
    %256 = vmatpush.msra.mxu0 %v233
    %257 = vmatpush.msra.mxu0 %v232
    %258 = vmatpush.msra.mxu0 %v231
    %259 = vmatpush.msra.mxu0 %v230
    %260 = vmatpush.msra.mxu0 %v229
    %261 = vmatpush.msra.mxu0 %v228
    %262 = vmatpush.msra.mxu0 %v227
    %263 = vmatmul.f32.gmra.mxu0 %v226
    %v264 = vpop.f32.mrf.mxu0
    %v265 = vadd.f32 %v245, %v264
    %266 = vdwg.mxu0
    %267 = vst [vmem:[#allocation5] sm:$0xff] %v265
    // Predicated region
    $region30: #{tpu_custom_call.1} parent=1 // pred_check
      _
    $region31: #{tpu_custom_call.1} parent=1 // pred_check_branch
      %269 = sbr.rel (0) target = $region33
    $region32: #{tpu_custom_call.1} parent=1 // pred_region
      %271 = vsyncadd [#allocation4], 0
      %s273 = sshll.u32 [#allocation5], 4
      %s274 = int_to_ptr.vmem [resolvable:$true] %s273
      %s275 = sshll.u32 %s6, 4
      %s276 = int_to_ptr.hbm [resolvable:$true] %s275
      %278 = dma.vmem_to_hbm [thread:$0]  %s274, 128, %s276, [#allocation4]
    $region33: #{tpu_custom_call.1} parent=1 // pred_fallthru
      _
    // Predicated region
    $region34: #{tpu_custom_call.1} parent=1 // pred_check
      _
    $region35: #{tpu_custom_call.1} parent=1 // pred_check_branch
      %280 = sbr.rel (0) target = $region37
    $region36: #{tpu_custom_call.1} parent=1 // pred_region
      %282 = dma.done [#allocation4], 128
    $region37: #{tpu_custom_call.1} parent=1 // pred_fallthru
      _
    %283 = vsyncpa [#allocation3], 1
    %284 = vsyncpa [#allocation4], 1

</llo_original>
